<compile_context>
chip_gen: v5e
topology: v5e:2x2
jax: 0.10.0
libtpu: 0.0.40
codegen_flags: <defaults>
</compile_context>

<pallas_src>
import jax
import jax.numpy as jnp
from jax import lax
from jax.experimental import pallas as pl
from jax.experimental.pallas import tpu as pltpu


# ----------------------------- small helpers --------------------------------

def _round_up(x: int, m: int) -> int:
    return (x + m - 1) // m * m


def _cdiv(a: int, b: int) -> int:
    return (a + b - 1) // b


def _largest_divisor(size: int, cap: int) -> int:
    best = 1
    for t in range(1, min(size, cap) + 1):
        if size % t == 0:
            best = t
    return best


def _detect_tpu():
    """(vmem_capacity_bytes, device_kind) with conservative fallbacks."""
    vmem_cap = 64 << 20          # v7x-conservative fallback
    kind = ""
    try:
        info = pltpu.get_tpu_info()
        vmem_cap = int(getattr(info, "vmem_capacity_bytes", vmem_cap))
    except Exception:
        pass
    try:
        kind = jax.devices()[0].device_kind.lower()
    except Exception:
        pass
    return vmem_cap, kind


def _default_caps(vmem_cap: int, kind: str):
    """Per-generation (max_tq, max_tkv, max_bt)."""
    if vmem_cap <= (64 << 20) or "v7" in kind:
        return 256, 256, 2       # v7x: 64 MiB VMEM, 2 TCs/chip
    if "v5" in kind:
        return 256, 256, 2       # v5e: slower HBM / 4x128 MXU — modest tiles
    return 256, 1024, 4          # v6e-class: 128 MiB VMEM, use larger kv tiles


def _flash_vmem_bytes(bt: int, tq: int, tkv: int, dp: int, itm: int) -> int:
    """Flash-kernel VMEM footprint: double-buffered blocks + weights + scratch
    + in-kernel f32 temporaries (s/p tiles, q-projection temp)."""
    blocks = 2 * itm * (bt * tq * dp + 2 * bt * tkv * dp + bt * tq * dp)
    weights = 2 * itm * (dp * dp + 8 * dp)
    scratch = itm * bt * tq * dp + 4 * (2 * bt * tq * 128 + bt * tq * dp)
    temps = 4 * (3 * bt * tq * tkv + bt * tq * dp)
    return blocks + weights + scratch + temps


def _proj_vmem_bytes(rows: int, dp: int, itm: int) -> int:
    blocks = 2 * itm * (rows * dp + 2 * rows * dp)          # ctx in, k/v out
    weights = 2 * itm * (dp * 2 * dp + 8 * 2 * dp)
    temps = 4 * rows * 2 * dp                               # f32 projection temp
    return blocks + weights + temps


# ------------------------------ kernels --------------------------------------

def _make_kv_proj_kernel(dp: int, rows: int):
    def kernel(ctx_ref, wkv_ref, bkv_ref, k_ref, v_ref):
        cm = ctx_ref[...].reshape(rows, dp)
        kvp = jnp.dot(cm, wkv_ref[...], preferred_element_type=jnp.float32)
        kvp = (kvp + bkv_ref[...]).reshape(1, rows, 2 * dp)
        # Slice at a 128-lane boundary (dp is a multiple of 128).
        k_ref[...] = kvp[..., :dp].astype(k_ref.dtype)
        v_ref[...] = kvp[..., dp:].astype(v_ref.dtype)
    return kernel


def _make_flash_kernel(scale: float, dp: int, tkv: int,
                       skv_true: int, skv_padded: int, approx_recip: bool):
    mask_keys = skv_padded != skv_true   # static: mask only when Skv was padded

    def kernel(x_ref, k_ref, v_ref, wq_ref, bq_ref, o_ref,
               q_s, m_s, l_s, acc_s):
        kv = pl.program_id(2)
        bt, tq, _ = q_s.shape

        @pl.when(kv == 0)
        def _init():
            # Q projection once per (batch-block, q-tile); cached across kv loop.
            xm = x_ref[...].reshape(bt * tq, dp)
            q = jnp.dot(xm, wq_ref[...], preferred_element_type=jnp.float32)
            q = (q + bq_ref[...]) * scale
            q_s[...] = q.reshape(bt, tq, dp).astype(q_s.dtype)
            m_s[...] = jnp.full(m_s.shape, -jnp.inf, dtype=m_s.dtype)
            l_s[...] = jnp.zeros(l_s.shape, dtype=l_s.dtype)
            acc_s[...] = jnp.zeros(acc_s.shape, dtype=acc_s.dtype)

        k = k_ref[...]
        v = v_ref[...]

        # Scores: contract last dims (MXU consumes the transposed operand; no
        # explicit k.T / XLU transpose is materialized).
        s = jnp.einsum("bqd,bkd->bqk", q_s[...], k,
                       preferred_element_type=jnp.float32)      # (Bt, TQ, TKV)

        if mask_keys:
            # Ceil-padding guarantees each kv tile has >= 1 real key, so the
            # tile max is always finite and l cannot be corrupted.
            col = lax.broadcasted_iota(jnp.int32, s.shape, 2) + kv * tkv
            s = jnp.where(col < skv_true, s, jnp.float32(-1e30))

        # Online softmax update.
        m_prev = m_s[...]
        m_new = jnp.maximum(m_prev, jnp.max(s, axis=-1, keepdims=True))
        alpha = jnp.exp(m_prev - m_new)
        p = jnp.exp(s - m_new)
        l_s[...] = alpha * l_s[...] + jnp.sum(p, axis=-1, keepdims=True)
        acc_s[...] = alpha * acc_s[...] + jnp.einsum(
            "bqk,bkd->bqd", p.astype(v.dtype), v,
            preferred_element_type=jnp.float32)                 # (Bt, TQ, Dp)
        m_s[...] = m_new

        @pl.when(kv == pl.num_programs(2) - 1)
        def _finalize():
            if approx_recip:
                out = acc_s[...] * pl.reciprocal(l_s[...], approx=True)
            else:
                out = acc_s[...] / l_s[...]
            o_ref[...] = out.astype(o_ref.dtype)

    return kernel


# ------------------------------ wrapper ---------------------------------------

def cross_modal_attention(x, context, wq, wk, wv, bq, bk, bv, *,
                          max_tq=None, max_tkv=None, max_bt=None,
                          approx_recip: bool = True):
    """x: (B, Sq, D), context: (B, Skv, D). Weights (D, D) pre-transposed; biases (D,)."""
    B, Sq, D = x.shape
    Bc, Skv, Dc = context.shape
    assert Bc == B and Dc == D
    scale = float(D) ** (-0.5)           # scale uses the original dim, like PyTorch

    dt = x.dtype
    itm = jnp.dtype(dt).itemsize

    # --- per-generation defaults + VMEM capacity ---
    vmem_cap, kind = _detect_tpu()
    d_tq, d_tkv, d_bt = _default_caps(vmem_cap, kind)
    max_tq = d_tq if max_tq is None else max_tq
    max_tkv = d_tkv if max_tkv is None else max_tkv
    max_bt = d_bt if max_bt is None else max_bt

    dp = _round_up(D, 128)

    # --- tile selection: free multiples of 8, no divisibility requirement ---
    tq = min(_round_up(Sq, 8), max(8, _round_up(max_tq, 8)))
    tkv = min(_round_up(Skv, 8), max(8, _round_up(max_tkv, 8)))
    bt = _largest_divisor(B, max(1, max_bt))

    # v7x megacore: keep a non-trivial "parallel" grid axis when possible.
    if B >= 2 and _cdiv(Sq, tq) < 2 and B // bt < 2:
        bt = _largest_divisor(B, max(1, B // 2))

    # Shrink tiles until the flash-kernel footprint fits ~55% of physical VMEM.
    budget = int(0.55 * vmem_cap)
    while _flash_vmem_bytes(bt, tq, tkv, dp, itm) > budget:
        if tkv > 128:
            tkv = max(8, _round_up(tkv // 2, 8))
        elif bt > 1:
            bt = _largest_divisor(B, max(1, bt // 2))
        elif tq > 8:
            tq = max(8, _round_up(tq // 2, 8))
        else:
            break

    sq_p = _cdiv(Sq, tq) * tq
    skv_p = _cdiv(Skv, tkv) * tkv
    nq, nkv, nb = sq_p // tq, skv_p // tkv, B // bt

    # --- conditional padding (skipped entirely when already aligned) ---
    if (sq_p, dp) != (Sq, D):
        xp = jnp.pad(x, ((0, 0), (0, sq_p - Sq), (0, dp - D)))
    else:
        xp = x
    if (skv_p, dp) != (Skv, D):
        cp = jnp.pad(context, ((0, 0), (0, skv_p - Skv), (0, dp - D)))
    else:
        cp = context

    if dp != D:
        wq_p = jnp.pad(wq, ((0, dp - D), (0, dp - D)))
        wk_p = jnp.pad(wk, ((0, dp - D), (0, dp - D)))
        wv_p = jnp.pad(wv, ((0, dp - D), (0, dp - D)))
        bq_p = jnp.pad(bq, (0, dp - D))
        bk_p = jnp.pad(bk, (0, dp - D))
        bv_p = jnp.pad(bv, (0, dp - D))
    else:
        wq_p, wk_p, wv_p, bq_p, bk_p, bv_p = wq, wk, wv, bq, bk, bv

    wq_p = wq_p.astype(dt)
    bq_p = bq_p.reshape(1, dp).astype(dt)
    wkv_p = jnp.concatenate([wk_p, wv_p], axis=1).astype(dt)             # (Dp, 2Dp)
    bkv_p = jnp.concatenate([bk_p, bv_p], axis=0).reshape(1, 2 * dp).astype(dt)
    xp = xp.astype(dt)
    cp = cp.astype(dt)

    # --- pass 1: fused K/V projection, done ONCE (hoisted out of q-tile loop) ---
    rows = tkv
    proj_est = _proj_vmem_bytes(rows, dp, itm)
    proj_vmem = int(min(max(1.25 * proj_est + (4 << 20), 16 << 20), 0.75 * vmem_cap))
    proj_cost = pl.CostEstimate(
        flops=int(2 * B * skv_p * dp * 2 * dp),
        transcendentals=0,
        bytes_accessed=int(itm * (B * skv_p * dp + dp * 2 * dp + 2 * dp
                                  + 2 * B * skv_p * dp)),
    )
    k_p, v_p = pl.pallas_call(
        _make_kv_proj_kernel(dp, rows),
        out_shape=(jax.ShapeDtypeStruct((B, skv_p, dp), dt),
                   jax.ShapeDtypeStruct((B, skv_p, dp), dt)),
        grid_spec=pltpu.PrefetchScalarGridSpec(
            num_scalar_prefetch=0,
            grid=(B, skv_p // rows),
            in_specs=[
                pl.BlockSpec((1, rows, dp), lambda b, r: (b, r, 0)),     # context
                pl.BlockSpec((dp, 2 * dp), lambda b, r: (0, 0)),         # wk|wv
                pl.BlockSpec((1, 2 * dp), lambda b, r: (0, 0)),          # bk|bv
            ],
            out_specs=[
                pl.BlockSpec((1, rows, dp), lambda b, r: (b, r, 0)),     # K
                pl.BlockSpec((1, rows, dp), lambda b, r: (b, r, 0)),     # V
            ],
        ),
        compiler_params=pltpu.CompilerParams(
            dimension_semantics=("parallel", "parallel"),
            vmem_limit_bytes=proj_vmem,
        ),
        cost_estimate=proj_cost,
    )(cp, wkv_p, bkv_p)

    # --- pass 2: flash attention over pre-projected K/V (Q projected in-kernel) ---
    flash_est = _flash_vmem_bytes(bt, tq, tkv, dp, itm)
    flash_vmem = int(min(max(1.25 * flash_est + (4 << 20), 16 << 20), 0.75 * vmem_cap))
    flash_cost = pl.CostEstimate(
        flops=int(2 * B * (sq_p * dp * dp + 2 * sq_p * skv_p * dp)),
        transcendentals=int(B * sq_p * skv_p),
        bytes_accessed=int(itm * (B * sq_p * dp                 # x read
                                  + nq * B * skv_p * 2 * dp     # K,V re-read per q-tile
                                  + dp * dp + dp                # wq, bq
                                  + B * sq_p * dp)),            # output writeback
    )

    out = pl.pallas_call(
        _make_flash_kernel(scale, dp, tkv, Skv, skv_p, approx_recip),
        out_shape=jax.ShapeDtypeStruct((B, sq_p, dp), dt),
        grid_spec=pltpu.PrefetchScalarGridSpec(
            num_scalar_prefetch=0,
            grid=(nb, nq, nkv),
            in_specs=[
                pl.BlockSpec((bt, tq, dp), lambda b, qi, kv: (b, qi, 0)),   # x
                pl.BlockSpec((bt, tkv, dp), lambda b, qi, kv: (b, kv, 0)),  # K
                pl.BlockSpec((bt, tkv, dp), lambda b, qi, kv: (b, kv, 0)),  # V
                pl.BlockSpec((dp, dp), lambda b, qi, kv: (0, 0)),           # wq
                pl.BlockSpec((1, dp), lambda b, qi, kv: (0, 0)),            # bq
            ],
            out_specs=pl.BlockSpec((bt, tq, dp), lambda b, qi, kv: (b, qi, 0)),
            scratch_shapes=[
                pltpu.VMEM((bt, tq, dp), dt),             # cached (scaled) q tile
                pltpu.VMEM((bt, tq, 1), jnp.float32),     # running max
                pltpu.VMEM((bt, tq, 1), jnp.float32),     # running denom
                pltpu.VMEM((bt, tq, dp), jnp.float32),    # output accumulator
            ],
        ),
        compiler_params=pltpu.CompilerParams(
            dimension_semantics=("parallel", "parallel", "arbitrary"),
            vmem_limit_bytes=flash_vmem,
        ),
        cost_estimate=flash_cost,
    )(xp, k_p, v_p, wq_p, bq_p)

    if (sq_p, dp) != (Sq, D):
        out = out[:, :Sq, :D]
    return out


# ------------------------------ reference / test -------------------------------

def reference(x, context, wq, wk, wv, bq, bk, bv):
    D = x.shape[-1]
    scale = float(D) ** (-0.5)
    q = x @ wq + bq
    k = context @ wk + bk
    v = context @ wv + bv
    s = jnp.einsum("bqd,bkd->bqk", q, k) * scale
    attn = jax.nn.softmax(s, axis=-1)
    return jnp.einsum("bqk,bkd->bqd", attn, v)


if __name__ == "__main__":
    key = jax.random.PRNGKey(0)
    # Small, deliberately "awkward" shapes so the padding / masking / multi-tile
    # flash path is exercised.
    B, Sq, Skv, D = 2, 12, 44, 32

    kx, kc, k1, k2, k3, k4, k5, k6 = jax.random.split(key, 8)
    x = jax.random.normal(kx, (B, Sq, D), dtype=jnp.float32)
    context = jax.random.normal(kc, (B, Skv, D), dtype=jnp.float32)

    # "Linear" params; stored as (D_in, D_out) = W.T relative to PyTorch.
    bound = 1.0 / (D ** 0.5)
    wq = jax.random.uniform(k1, (D, D), jnp.float32, -bound, bound)
    wk = jax.random.uniform(k2, (D, D), jnp.float32, -bound, bound)
    wv = jax.random.uniform(k3, (D, D), jnp.float32, -bound, bound)
    bq = jax.random.uniform(k4, (D,), jnp.float32, -bound, bound)
    bk = jax.random.uniform(k5, (D,), jnp.float32, -bound, bound)
    bv = jax.random.uniform(k6, (D,), jnp.float32, -bound, bound)

    ref = reference(x, context, wq, wk, wv, bq, bk, bv)

    # 1) Small explicit tile caps: Sq -> 2 q-tiles of 8, Skv -> 3 kv-tiles of 16
    #    (last partially masked), bt=2 -> exercises the full multi-tile flash loop.
    out = cross_modal_attention(x, context, wq, wk, wv, bq, bk, bv,
                                max_tq=8, max_tkv=16, max_bt=4)
    out = jax.block_until_ready(out)
    assert out.shape == (B, Sq, D)
    err = float(jnp.max(jnp.abs(out - ref)))
    assert jnp.allclose(out, ref, atol=2e-3, rtol=2e-3), \
        f"mismatch vs reference (max abs err {err:.3e})"

    # 2) Default (generation-detected) tile caps: exercises the auto VMEM budget
    #    path and the single-kv-tile init+finalize-in-one-step path.
    out2 = cross_modal_attention(x, context, wq, wk, wv, bq, bk, bv)
    out2 = jax.block_until_ready(out2)
    err2 = float(jnp.max(jnp.abs(out2 - ref)))
    assert jnp.allclose(out2, ref, atol=2e-3, rtol=2e-3), \
        f"mismatch vs reference (default caps, max abs err {err2:.3e})"

    print("KERNEL_OK")
</pallas_src>

<mosaic_0001>
module attributes {stable_mosaic.version = 11 : i64} {
  func.func @kernel(%arg0: i32, %arg1: i32, %arg2: memref<1x16x128xf32, #tpu.memory_space<vmem>>, %arg3: memref<128x256xf32, #tpu.memory_space<vmem>>, %arg4: memref<1x256xf32, #tpu.memory_space<vmem>>, %arg5: memref<1x16x128xf32, #tpu.memory_space<vmem>>, %arg6: memref<1x16x128xf32, #tpu.memory_space<vmem>>) attributes {dimension_semantics = [#tpu.dimension_semantics<parallel>, #tpu.dimension_semantics<parallel>], iteration_bounds = array<i64: 2, 3>, scalar_prefetch = 0 : i64, scratch_operands = 0 : i64, tpu.core_type = #tpu.core_type<tc>, window_params = [{transform_indices = @transform_0, window_bounds = array<i64: 1, 16, 128>}, {pipeline_mode = #tpu.pipeline_mode<synchronous>, transform_indices = @transform_1, window_bounds = array<i64: 128, 256>}, {pipeline_mode = #tpu.pipeline_mode<synchronous>, transform_indices = @transform_2, window_bounds = array<i64: 1, 256>}, {transform_indices = @transform_3, window_bounds = array<i64: 1, 16, 128>}, {transform_indices = @transform_4, window_bounds = array<i64: 1, 16, 128>}]} {
    %c0 = arith.constant 0 : index
    %c0_0 = arith.constant 0 : index
    %c0_1 = arith.constant 0 : index
    %0 = vector.load %arg2[%c0, %c0_0, %c0_1] : memref<1x16x128xf32, #tpu.memory_space<vmem>>, vector<1x16x128xf32>
    %1 = vector.shape_cast %0 : vector<1x16x128xf32> to vector<16x128xf32>
    %c0_2 = arith.constant 0 : index
    %c0_3 = arith.constant 0 : index
    %2 = vector.load %arg3[%c0_2, %c0_3] : memref<128x256xf32, #tpu.memory_space<vmem>>, vector<128x256xf32>
    %cst = arith.constant dense<0.000000e+00> : vector<16x256xf32>
    %3 = tpu.matmul %1, %2, %cst {dimension_numbers = #tpu.dot_dimension_numbers<[1], [0], [0], [1], [0, 0, 1, 1], [], []>} : vector<16x128xf32>, vector<128x256xf32>, vector<16x256xf32> -> vector<16x256xf32>
    %c0_4 = arith.constant 0 : index
    %c0_5 = arith.constant 0 : index
    %4 = vector.load %arg4[%c0_4, %c0_5] : memref<1x256xf32, #tpu.memory_space<vmem>>, vector<1x256xf32>
    %5 = vector.broadcast %4 : vector<1x256xf32> to vector<16x256xf32>
    %6 = arith.addf %3, %5 : vector<16x256xf32>
    %7 = vector.shape_cast %6 : vector<16x256xf32> to vector<1x16x256xf32>
    %8 = vector.extract_strided_slice %7 {offsets = [0, 0, 0], sizes = [1, 16, 128], strides = [1, 1, 1]} : vector<1x16x256xf32> to vector<1x16x128xf32>
    %c0_6 = arith.constant 0 : index
    %c0_7 = arith.constant 0 : index
    %c0_8 = arith.constant 0 : index
    %9 = vector.load %arg5[%c0_6, %c0_7, %c0_8] : memref<1x16x128xf32, #tpu.memory_space<vmem>>, vector<1x16x128xf32>
    tpu.vector_store %arg5[%c0_6, %c0_7, %c0_8], %8 {strides = array<i32>} : memref<1x16x128xf32, #tpu.memory_space<vmem>>, vector<1x16x128xf32>,
    %10 = vector.extract_strided_slice %7 {offsets = [0, 0, 128], sizes = [1, 16, 128], strides = [1, 1, 1]} : vector<1x16x256xf32> to vector<1x16x128xf32>
    %c0_9 = arith.constant 0 : index
    %c0_10 = arith.constant 0 : index
    %c0_11 = arith.constant 0 : index
    %11 = vector.load %arg6[%c0_9, %c0_10, %c0_11] : memref<1x16x128xf32, #tpu.memory_space<vmem>>, vector<1x16x128xf32>
    tpu.vector_store %arg6[%c0_9, %c0_10, %c0_11], %10 {strides = array<i32>} : memref<1x16x128xf32, #tpu.memory_space<vmem>>, vector<1x16x128xf32>,
    return
  }
  func.func @transform_0(%arg0: i32, %arg1: i32) -> (i32, i32, i32) {
    %c0_i32 = arith.constant 0 : i32
    %c0_i32_0 = arith.constant 0 : i32
    return %arg0, %arg1, %c0_i32 : i32, i32, i32
  }
  func.func @transform_1(%arg0: i32, %arg1: i32) -> (i32, i32) {
    %c0_i32 = arith.constant 0 : i32
    %c0_i32_0 = arith.constant 0 : i32
    %c0_i32_1 = arith.constant 0 : i32
    return %c0_i32, %c0_i32_0 : i32, i32
  }
  func.func @transform_2(%arg0: i32, %arg1: i32) -> (i32, i32) {
    %c0_i32 = arith.constant 0 : i32
    %c0_i32_0 = arith.constant 0 : i32
    %c0_i32_1 = arith.constant 0 : i32
    return %c0_i32, %c0_i32_0 : i32, i32
  }
  func.func @transform_3(%arg0: i32, %arg1: i32) -> (i32, i32, i32) {
    %c0_i32 = arith.constant 0 : i32
    %c0_i32_0 = arith.constant 0 : i32
    return %arg0, %arg1, %c0_i32 : i32, i32, i32
  }
  func.func @transform_4(%arg0: i32, %arg1: i32) -> (i32, i32, i32) {
    %c0_i32 = arith.constant 0 : i32
    %c0_i32_0 = arith.constant 0 : i32
    return %arg0, %arg1, %c0_i32 : i32, i32, i32
  }
}

</mosaic_0001>

<llo_original>
// kernel: tpu_custom_call.1
$region0: #{tpu_custom_call.1}
  #allocation0 [shape = 'u32[]', space=smem, size = 0x4, offset = 0x4, fixed_abs, tag = 'smem constant byte address 0x4 - core index']
  #allocation1 [shape = 'u32[72,128]{1,0:T(1,128)}', space=vmem, size = 0x9000, scoped, tag = 'internal scratch']
  %s0 = inlined_call_operand.hbm [shape: f32[2,48,128], index: 0, kind: input, shape index: {}]
  %s1 = inlined_call_operand.hbm [shape: f32[128,256], index: 1, kind: input, shape index: {}]
  %s2 = inlined_call_operand.hbm [shape: f32[1,256], index: 2, kind: input, shape index: {}]
  %s3 = inlined_call_operand.hbm [shape: f32[2,48,128], index: 3, kind: output, shape index: {0}]
  %s4 = inlined_call_operand.hbm [shape: f32[2,48,128], index: 4, kind: output, shape index: {1}]
  %5 = xla_tuple %s3, %s4
  %s6 = sld [smem:[#allocation0]]
  $region65: #{tpu_custom_call.1} parent=0
    _
  %s8 = ssub.s32 1, %s6
  %s9 = scalar_select 0, %s8, %s6
  $region1: #{tpu_custom_call.1} parent=0
    #allocation2 [shape = 'u8[16384]{0}', space=vmem, size = 0x4000, scoped, tag = 'input window, operand 0']
    #allocation3 [shape = 's32[2]{0}', space=sflag, size = 0x8, scoped, tag = 'scoped memory for tpu_custom_call.1']
    #allocation4 [shape = 's32[2]{0}', space=sflag, size = 0x8, scoped, tag = 'scoped memory for tpu_custom_call.1']
    #allocation5 [shape = 'u8[131072]{0}', space=vmem, size = 0x20000, scoped, tag = 'input window, operand 1, single buffered']
    #allocation6 [shape = 's32[1]{0}', space=sflag, size = 0x4, scoped, tag = 'scoped memory for tpu_custom_call.1']
    #allocation7 [shape = 'u8[1024]{0}', space=vmem, size = 0x400, scoped, tag = 'input window, operand 2, single buffered']
    #allocation8 [shape = 'u8[16384]{0}', space=vmem, size = 0x4000, scoped, tag = 'output window, operand 0']
    #allocation9 [shape = 'u8[16384]{0}', space=vmem, size = 0x4000, scoped, tag = 'output window, operand 1']
    #allocation10 [shape = 's32[2]{0}', space=sflag, size = 0x8, scoped, tag = 'scoped memory for tpu_custom_call.1']
    %10 = vsyncpa [#allocation3], 0
    %s11 = scalar_lea.sflag [#allocation3], 1
    %12 = vsyncpa %s11, 0
    %13 = vsyncpa [#allocation6], 0
    %14 = vsyncpa [#allocation4], 0
    %s15 = scalar_lea.sflag [#allocation4], 1
    %16 = vsyncpa %s15, 0
    %17 = vsyncpa [#allocation10], 0
    %s18 = scalar_lea.sflag [#allocation10], 1
    %19 = vsyncpa %s18, 0
    loop: start=0, step=1, limit=8
    $region2: #{tpu_custom_call.1} parent=1 // loop_pre_header
      _
    $region3: #{tpu_custom_call.1} parent=1 // loop_header
      %s21 = sphi 0, %s25
      %p22 = scmp.ge.s32.totalorder %s21, 8
      %s28 = sphi 0, %s40
      %s29 = sphi 0, %s36
      %s30 = sphi 0, %s28
      %s31 = sphi 0, %s29
      %s32 = sphi 0, %s30
      %s33 = sphi 0, %s31
      %s45 = sphi 0, %s47
      %s48 = sphi 0, %s45
      %s49 = sphi 0, %s48
      %s65 = sphi 0, %s49
      %s69 = sphi 0, %s69
      %s71 = sphi 0, %s69
      %s72 = sphi 0, %s71
      %s86 = sphi 0, %s72
      %s90 = sphi 0, %s90
      %s92 = sphi 0, %s90
      %s93 = sphi 0, %s92
      %s107 = sphi 0, %s93
      %s115 = sphi 0, %s117
      %s118 = sphi 0, %s115
      %s119 = sphi 0, %s118
      %s135 = sphi 0, %s119
      %s143 = sphi 0, %s145
      %s146 = sphi 0, %s143
      %s147 = sphi 0, %s146
      %s163 = sphi 0, %s147
    $region4: #{tpu_custom_call.1} parent=1 // loop_header_branch
      %24 = sbr.rel (%p22) target = $region8
    $region5: #{tpu_custom_call.1} parent=1 // loop_body
      %s26 = ssub.s32 %s21, 1
      %s27 = ssub.s32 %s21, 2
      %s34 = sadd.s32 1, %s29
      %p35 = scmp.ge.s32.totalorder %s34, 3
      %s36 = scalar_select %p35, 0, %s34
      %s37 = sadd.s32 1, %s28
      %s38 = scalar_select %p35, %s37, %s28
      %p39 = scmp.ge.s32.totalorder %s38, 2
      %s40 = scalar_select %p39, 0, %s38
      %s41 = ssub.s32 %s28, %s40
      %s42 = ssub.s32 %s29, %s36
      %s43 = sor.u32 %s41, %s42
      %p44 = scmp.eq.s32.totalorder %s43, 0
      %s46 = sadd.s32 %s45, 1
      %s47 = scalar_select %p44, %s45, %s46
      %p50 = pneg %p44
      %p51 = scmp.eq.s32.totalorder %s21, 5
      %p52 = por %p50, %p51
      %p53 = scmp.ne.s32.totalorder %s45, %s48
      %p54 = scmp.eq.s32.totalorder %s21, 0
      %p55 = por %p53, %p54
      %p56 = scmp.ne.s32.totalorder %s45, %s48
      %p57 = scmp.eq.s32.totalorder %s26, 5
      %p58 = por %p56, %p57
      %p59 = scmp.ne.s32.totalorder %s48, %s49
      %p60 = scmp.eq.s32.totalorder %s26, 0
      %p61 = por %p59, %p60
      %p62 = scmp.ne.s32.totalorder %s48, %s49
      %p63 = scmp.eq.s32.totalorder %s27, 5
      %p64 = por %p62, %p63
      %p66 = scmp.ne.s32.totalorder %s49, %s65
      %p67 = scmp.eq.s32.totalorder %s27, 0
      %p68 = por %p66, %p67
      %s70 = sadd.s32 %s69, 1
      %p73 = scmp.eq.s32.totalorder %s21, 5
      %p74 = scmp.ne.s32.totalorder %s69, %s71
      %p75 = scmp.eq.s32.totalorder %s21, 0
      %p76 = por %p74, %p75
      %p77 = scmp.ne.s32.totalorder %s69, %s71
      %p78 = scmp.eq.s32.totalorder %s26, 5
      %p79 = por %p77, %p78
      %p80 = scmp.ne.s32.totalorder %s71, %s72
      %p81 = scmp.eq.s32.totalorder %s26, 0
      %p82 = por %p80, %p81
      %p83 = scmp.ne.s32.totalorder %s71, %s72
      %p84 = scmp.eq.s32.totalorder %s27, 5
      %p85 = por %p83, %p84
      %p87 = scmp.ne.s32.totalorder %s72, %s86
      %p88 = scmp.eq.s32.totalorder %s27, 0
      %p89 = por %p87, %p88
      %s91 = sadd.s32 %s90, 1
      %p94 = scmp.eq.s32.totalorder %s21, 5
      %p95 = scmp.ne.s32.totalorder %s90, %s92
      %p96 = scmp.eq.s32.totalorder %s21, 0
      %p97 = por %p95, %p96
      %p98 = scmp.ne.s32.totalorder %s90, %s92
      %p99 = scmp.eq.s32.totalorder %s26, 5
      %p100 = por %p98, %p99
      %p101 = scmp.ne.s32.totalorder %s92, %s93
      %p102 = scmp.eq.s32.totalorder %s26, 0
      %p103 = por %p101, %p102
      %p104 = scmp.ne.s32.totalorder %s92, %s93
      %p105 = scmp.eq.s32.totalorder %s27, 5
      %p106 = por %p104, %p105
      %p108 = scmp.ne.s32.totalorder %s93, %s107
      %p109 = scmp.eq.s32.totalorder %s27, 0
      %p110 = por %p108, %p109
      %s111 = ssub.s32 %s28, %s40
      %s112 = ssub.s32 %s29, %s36
      %s113 = sor.u32 %s111, %s112
      %p114 = scmp.eq.s32.totalorder %s113, 0
      %s116 = sadd.s32 %s115, 1
      %s117 = scalar_select %p114, %s115, %s116
      %p120 = pneg %p114
      %p121 = scmp.eq.s32.totalorder %s21, 5
      %p122 = por %p120, %p121
      %p123 = scmp.ne.s32.totalorder %s115, %s118
      %p124 = scmp.eq.s32.totalorder %s21, 0
      %p125 = por %p123, %p124
      %p126 = scmp.ne.s32.totalorder %s115, %s118
      %p127 = scmp.eq.s32.totalorder %s26, 5
      %p128 = por %p126, %p127
      %p129 = scmp.ne.s32.totalorder %s118, %s119
      %p130 = scmp.eq.s32.totalorder %s26, 0
      %p131 = por %p129, %p130
      %p132 = scmp.ne.s32.totalorder %s118, %s119
      %p133 = scmp.eq.s32.totalorder %s27, 5
      %p134 = por %p132, %p133
      %p136 = scmp.ne.s32.totalorder %s119, %s135
      %p137 = scmp.eq.s32.totalorder %s27, 0
      %p138 = por %p136, %p137
      %s139 = ssub.s32 %s28, %s40
      %s140 = ssub.s32 %s29, %s36
      %s141 = sor.u32 %s139, %s140
      %p142 = scmp.eq.s32.totalorder %s141, 0
      %s144 = sadd.s32 %s143, 1
      %s145 = scalar_select %p142, %s143, %s144
      %p148 = pneg %p142
      %p149 = scmp.eq.s32.totalorder %s21, 5
      %p150 = por %p148, %p149
      %p151 = scmp.ne.s32.totalorder %s143, %s146
      %p152 = scmp.eq.s32.totalorder %s21, 0
      %p153 = por %p151, %p152
      %p154 = scmp.ne.s32.totalorder %s143, %s146
      %p155 = scmp.eq.s32.totalorder %s26, 5
      %p156 = por %p154, %p155
      %p157 = scmp.ne.s32.totalorder %s146, %s147
      %p158 = scmp.eq.s32.totalorder %s26, 0
      %p159 = por %p157, %p158
      %p160 = scmp.ne.s32.totalorder %s146, %s147
      %p161 = scmp.eq.s32.totalorder %s27, 5
      %p162 = por %p160, %p161
      %p164 = scmp.ne.s32.totalorder %s147, %s163
      %p165 = scmp.eq.s32.totalorder %s27, 0
      %p166 = por %p164, %p165
      %p167 = scmp.le.s32.totalorder 1, %s21
      %p168 = scmp.lt.s32.totalorder %s21, 7
      %p169 = pnand %p167, %p168
      %p170 = pneg %p169
      // Predicated region
      $region9: #{tpu_custom_call.1} parent=5 // pred_check
        _
      $region10: #{tpu_custom_call.1} parent=5 // pred_check_branch
        %172 = sbr.rel (%p169) target = $region12
      $region11: #{tpu_custom_call.1} parent=5 // pred_region
        %s173 = ssub.s32 %s21, 1
        // Predicated region
        $region13: #{tpu_custom_call.1} parent=11 // pred_check
          %p174 = pneg %p82
        $region14: #{tpu_custom_call.1} parent=11 // pred_check_branch
          %176 = sbr.rel (%p174) target = $region16
        $region15: #{tpu_custom_call.1} parent=11 // pred_region
          %178 = vsyncadd [#allocation6], 0
          %s179 = sshll.u32 %s1, 4
          %s180 = int_to_ptr.hbm [resolvable:$true] %s179
          %s181 = sshll.u32 [#allocation5], 4
          %s182 = int_to_ptr.vmem [resolvable:$true] %s181
          %187 = dma.hbm_to_vmem [thread:$0]  %s180, 4096, %s182, [#allocation6], 256, 256, 16
        $region16: #{tpu_custom_call.1} parent=11 // pred_fallthru
          _
        // Predicated region
        $region17: #{tpu_custom_call.1} parent=11 // pred_check
          %p188 = pneg %p103
        $region18: #{tpu_custom_call.1} parent=11 // pred_check_branch
          %190 = sbr.rel (%p188) target = $region20
        $region19: #{tpu_custom_call.1} parent=11 // pred_region
          %192 = vsyncadd [#allocation6], 0
          %s194 = sshll.u32 %s2, 4
          %s195 = int_to_ptr.hbm [resolvable:$true] %s194
          %s196 = sshll.u32 [#allocation7], 4
          %s197 = int_to_ptr.vmem [resolvable:$true] %s196
          %199 = dma.hbm_to_vmem [thread:$0]  %s195, 32, %s197, [#allocation6]
        $region20: #{tpu_custom_call.1} parent=11 // pred_fallthru
          _
      $region12: #{tpu_custom_call.1} parent=5 // pred_fallthru
        _
      %p200 = scmp.lt.s32.totalorder %s21, 6
      // Predicated region
      $region21: #{tpu_custom_call.1} parent=5 // pred_check
        %p201 = pneg %p200
      $region22: #{tpu_custom_call.1} parent=5 // pred_check_branch
        %203 = sbr.rel (%p201) target = $region24
      $region23: #{tpu_custom_call.1} parent=5 // pred_region
        // Predicated region
        $region25: #{tpu_custom_call.1} parent=23 // pred_check
          %p204 = pneg %p55
        $region26: #{tpu_custom_call.1} parent=23 // pred_check_branch
          %206 = sbr.rel (%p204) target = $region28
        $region27: #{tpu_custom_call.1} parent=23 // pred_region
          %s207 = sand.u32 %s45, 1
          %s208 = scalar_lea.sflag [#allocation3], %s207
          %s209 = sand.u32 %s45, 1
          %s210 = smul.addr %s209, 16
          %s211 = scalar_lea.vmem [#allocation2], %s210
          %s212 = smul.u32 2, %s29
          %214 = vsyncadd %s208, 0
          %s215 = smul.addr %s28, 6
          %s216 = sadd.s32 %s212, %s215
          %s217 = smul.addr %s216, 8
          %s218 = scalar_lea.hbm %s0, %s217
          %s219 = sshll.u32 %s218, 4
          %s220 = int_to_ptr.hbm [resolvable:$true] %s219
          %s221 = sshll.u32 %s211, 4
          %s222 = int_to_ptr.vmem [resolvable:$true] %s221
          %227 = dma.hbm_to_vmem [thread:$0]  %s220, 256, %s222, %s208, 128, 128, 8
        $region28: #{tpu_custom_call.1} parent=23 // pred_fallthru
          _
      $region24: #{tpu_custom_call.1} parent=5 // pred_fallthru
        _
      %p228 = scmp.le.s32.totalorder 1, %s21
      %p229 = scmp.lt.s32.totalorder %s21, 7
      %p230 = pnand %p228, %p229
      %p231 = pneg %p230
      // Predicated region
      $region29: #{tpu_custom_call.1} parent=5 // pred_check
        _
      $region30: #{tpu_custom_call.1} parent=5 // pred_check_branch
        %233 = sbr.rel (%p230) target = $region32
      $region31: #{tpu_custom_call.1} parent=5 // pred_region
        %s234 = ssub.s32 %s21, 1
        %s235 = sand.u32 %s48, 1
        %s236 = scalar_lea.sflag [#allocation3], %s235
        %s237 = sand.u32 %s48, 1
        %s238 = smul.addr %s237, 16
        %s239 = scalar_lea.vmem [#allocation2], %s238
        // Predicated region
        $region33: #{tpu_custom_call.1} parent=31 // pred_check
          %p240 = pneg %p61
        $region34: #{tpu_custom_call.1} parent=31 // pred_check_branch
          %242 = sbr.rel (%p240) target = $region36
        $region35: #{tpu_custom_call.1} parent=31 // pred_region
          %244 = dma.done %s236, 256
        $region36: #{tpu_custom_call.1} parent=31 // pred_fallthru
          _
        // Predicated region
        $region37: #{tpu_custom_call.1} parent=31 // pred_check
          %p245 = pneg %p82
        $region38: #{tpu_custom_call.1} parent=31 // pred_check_branch
          %247 = sbr.rel (%p245) target = $region40
        $region39: #{tpu_custom_call.1} parent=31 // pred_region
          %249 = dma.done [#allocation6], 4096
        $region40: #{tpu_custom_call.1} parent=31 // pred_fallthru
          _
        // Predicated region
        $region41: #{tpu_custom_call.1} parent=31 // pred_check
          %p250 = pneg %p103
        $region42: #{tpu_custom_call.1} parent=31 // pred_check_branch
          %252 = sbr.rel (%p250) target = $region44
        $region43: #{tpu_custom_call.1} parent=31 // pred_region
          %254 = dma.done [#allocation6], 32
        $region44: #{tpu_custom_call.1} parent=31 // pred_fallthru
          _
        %s255 = sand.u32 %s48, 1
        %s256 = scalar_lea.sflag [#allocation3], %s255
        %s257 = sand.u32 %s48, 1
        %s258 = smul.addr %s257, 16
        %s259 = scalar_lea.vmem [#allocation2], %s258
        %p260 = pneg %p61
        %p261 = pneg %p58
        %p262 = pneg %p82
        %p263 = pneg %p79
        %p264 = pneg %p103
        %p265 = pneg %p100
        %p266 = pneg %p131
        %p267 = pneg %p128
        %s268 = sand.u32 %s118, 1
        %s269 = scalar_lea.sflag [#allocation4], %s268
        %s270 = sand.u32 %s118, 1
        %s271 = smul.addr %s270, 16
        %s272 = scalar_lea.vmem [#allocation8], %s271
        %p273 = pneg %p159
        %p274 = pneg %p156
        %s275 = sand.u32 %s146, 1
        %s276 = scalar_lea.sflag [#allocation10], %s275
        %s277 = sand.u32 %s146, 1
        %s278 = smul.addr %s277, 16
        %s279 = scalar_lea.vmem [#allocation9], %s278
        %s280 = smul.u32 2, %s31
        %s281 = smul.u32 2, %s31
        %s282 = smul.u32 2, %s31
        %v283 = vld [vmem:[%s239] sm:$0xff]
        %v284 = vld [vmem:[%s239 + $0x8] sm:$0xff]
        %v285 = vld [vmem:[#allocation5] sm:$0xff]
        %v286 = vld [vmem:[#allocation5 + $0x8] sm:$0xff]
        %v287 = vld [vmem:[#allocation5 + $0x10] sm:$0xff]
        %v288 = vld [vmem:[#allocation5 + $0x18] sm:$0xff]
        %v289 = vld [vmem:[#allocation5 + $0x20] sm:$0xff]
        %v290 = vld [vmem:[#allocation5 + $0x28] sm:$0xff]
        %v291 = vld [vmem:[#allocation5 + $0x30] sm:$0xff]
        %v292 = vld [vmem:[#allocation5 + $0x38] sm:$0xff]
        %v293 = vld [vmem:[#allocation5 + $0x40] sm:$0xff]
        %v294 = vld [vmem:[#allocation5 + $0x48] sm:$0xff]
        %v295 = vld [vmem:[#allocation5 + $0x50] sm:$0xff]
        %v296 = vld [vmem:[#allocation5 + $0x58] sm:$0xff]
        %v297 = vld [vmem:[#allocation5 + $0x60] sm:$0xff]
        %v298 = vld [vmem:[#allocation5 + $0x68] sm:$0xff]
        %v299 = vld [vmem:[#allocation5 + $0x70] sm:$0xff]
        %v300 = vld [vmem:[#allocation5 + $0x78] sm:$0xff]
        %v301 = vld [vmem:[#allocation5 + $0x80] sm:$0xff]
        %v302 = vld [vmem:[#allocation5 + $0x88] sm:$0xff]
        %v303 = vld [vmem:[#allocation5 + $0x90] sm:$0xff]
        %v304 = vld [vmem:[#allocation5 + $0x98] sm:$0xff]
        %v305 = vld [vmem:[#allocation5 + $0xa0] sm:$0xff]
        %v306 = vld [vmem:[#allocation5 + $0xa8] sm:$0xff]
        %v307 = vld [vmem:[#allocation5 + $0xb0] sm:$0xff]
        %v308 = vld [vmem:[#allocation5 + $0xb8] sm:$0xff]
        %v309 = vld [vmem:[#allocation5 + $0xc0] sm:$0xff]
        %v310 = vld [vmem:[#allocation5 + $0xc8] sm:$0xff]
        %v311 = vld [vmem:[#allocation5 + $0xd0] sm:$0xff]
        %v312 = vld [vmem:[#allocation5 + $0xd8] sm:$0xff]
        %v313 = vld [vmem:[#allocation5 + $0xe0] sm:$0xff]
        %v314 = vld [vmem:[#allocation5 + $0xe8] sm:$0xff]
        %v315 = vld [vmem:[#allocation5 + $0xf0] sm:$0xff]
        %v316 = vld [vmem:[#allocation5 + $0xf8] sm:$0xff]
        %v317 = vld [vmem:[#allocation7] sm:$0x3]
        %v319 = vperm.slane %v317, 0
        %v320 = vperm.slane %v317, 1
        %323 = vmatpush.msra.mxu0 %v315
        %324 = vmatpush.msra.mxu0 %v313
        %325 = vmatpush.msra.mxu0 %v311
        %326 = vmatpush.msra.mxu0 %v309
        %327 = vmatpush.msra.mxu0 %v307
        %328 = vmatpush.msra.mxu0 %v305
        %329 = vmatpush.msra.mxu0 %v303
        %330 = vmatpush.msra.mxu0 %v301
        %331 = vmatpush.msra.mxu0 %v299
        %332 = vmatpush.msra.mxu0 %v297
        %333 = vmatpush.msra.mxu0 %v295
        %334 = vmatpush.msra.mxu0 %v293
        %335 = vmatpush.msra.mxu0 %v291
        %336 = vmatpush.msra.mxu0 %v289
        %337 = vmatpush.msra.mxu0 %v287
        %338 = vmatpush.msra.mxu0 %v285
        %339 = vmatmul.f32.gmra.mxu0 %v283
        %v340 = vpop.f32.mrf.mxu0
        %v341 = vadd.f32 %v319, %v340
        %342 = vmatmul.f32.gmra.mxu0 %v284
        %v343 = vpop.f32.mrf.mxu0
        %v344 = vadd.f32 %v319, %v343
        %345 = vdwg.mxu0
        %346 = vmatpush.msra.mxu0 %v316
        %347 = vmatpush.msra.mxu0 %v314
        %348 = vmatpush.msra.mxu0 %v312
        %349 = vmatpush.msra.mxu0 %v310
        %350 = vmatpush.msra.mxu0 %v308
        %351 = vmatpush.msra.mxu0 %v306
        %352 = vmatpush.msra.mxu0 %v304
        %353 = vmatpush.msra.mxu0 %v302
        %354 = vmatpush.msra.mxu0 %v300
        %355 = vmatpush.msra.mxu0 %v298
        %356 = vmatpush.msra.mxu0 %v296
        %357 = vmatpush.msra.mxu0 %v294
        %358 = vmatpush.msra.mxu0 %v292
        %359 = vmatpush.msra.mxu0 %v290
        %360 = vmatpush.msra.mxu0 %v288
        %361 = vmatpush.msra.mxu0 %v286
        %362 = vmatmul.f32.gmra.mxu0 %v283
        %v363 = vpop.f32.mrf.mxu0
        %v364 = vadd.f32 %v320, %v363
        %365 = vmatmul.f32.gmra.mxu0 %v284
        %v366 = vpop.f32.mrf.mxu0
        %v367 = vadd.f32 %v320, %v366
        %368 = vdwg.mxu0
        %369 = vst [vmem:[%s272] sm:$0xff] %v341
        %370 = vst [vmem:[%s272 + $0x8] sm:$0xff] %v344
        %371 = vst [vmem:[%s279] sm:$0xff] %v364
        %372 = vst [vmem:[%s279 + $0x8] sm:$0xff] %v367
        %s373 = sand.u32 %s118, 1
        %s374 = scalar_lea.sflag [#allocation4], %s373
        %s375 = sand.u32 %s118, 1
        %s376 = smul.addr %s375, 16
        %s377 = scalar_lea.vmem [#allocation8], %s376
        %s378 = sand.u32 %s146, 1
        %s379 = scalar_lea.sflag [#allocation10], %s378
        %s380 = sand.u32 %s146, 1
        %s381 = smul.addr %s380, 16
        %s382 = scalar_lea.vmem [#allocation9], %s381
        // Predicated region
        $region45: #{tpu_custom_call.1} parent=31 // pred_check
          %p383 = pneg %p128
        $region46: #{tpu_custom_call.1} parent=31 // pred_check_branch
          %385 = sbr.rel (%p383) target = $region48
        $region47: #{tpu_custom_call.1} parent=31 // pred_region
          %s386 = smul.u32 2, %s31
          %388 = vsyncadd %s374, 0
          %s389 = smul.addr %s30, 6
          %s390 = sadd.s32 %s386, %s389
          %s391 = smul.addr %s390, 8
          %s392 = scalar_lea.hbm %s3, %s391
          %s393 = sshll.u32 %s377, 4
          %s394 = int_to_ptr.vmem [resolvable:$true] %s393
          %s395 = sshll.u32 %s392, 4
          %s396 = int_to_ptr.hbm [resolvable:$true] %s395
          %401 = dma.vmem_to_hbm [thread:$0]  %s394, 256, %s396, %s374, 128, 128, 8
        $region48: #{tpu_custom_call.1} parent=31 // pred_fallthru
          _
        // Predicated region
        $region49: #{tpu_custom_call.1} parent=31 // pred_check
          %p402 = pneg %p156
        $region50: #{tpu_custom_call.1} parent=31 // pred_check_branch
          %404 = sbr.rel (%p402) target = $region52
        $region51: #{tpu_custom_call.1} parent=31 // pred_region
          %s405 = smul.u32 2, %s31
          %407 = vsyncadd %s379, 0
          %s408 = smul.addr %s30, 6
          %s409 = sadd.s32 %s405, %s408
          %s410 = smul.addr %s409, 8
          %s411 = scalar_lea.hbm %s4, %s410
          %s412 = sshll.u32 %s382, 4
          %s413 = int_to_ptr.vmem [resolvable:$true] %s412
          %s414 = sshll.u32 %s411, 4
          %s415 = int_to_ptr.hbm [resolvable:$true] %s414
          %420 = dma.vmem_to_hbm [thread:$0]  %s413, 256, %s415, %s379, 128, 128, 8
        $region52: #{tpu_custom_call.1} parent=31 // pred_fallthru
          _
      $region32: #{tpu_custom_call.1} parent=5 // pred_fallthru
        _
      %p421 = scmp.le.s32.totalorder 2, %s21
      // Predicated region
      $region53: #{tpu_custom_call.1} parent=5 // pred_check
        %p422 = pneg %p421
      $region54: #{tpu_custom_call.1} parent=5 // pred_check_branch
        %424 = sbr.rel (%p422) target = $region56
      $region55: #{tpu_custom_call.1} parent=5 // pred_region
        %s425 = ssub.s32 %s21, 2
        // Predicated region
        $region57: #{tpu_custom_call.1} parent=55 // pred_check
          %p426 = pneg %p134
        $region58: #{tpu_custom_call.1} parent=55 // pred_check_branch
          %428 = sbr.rel (%p426) target = $region60
        $region59: #{tpu_custom_call.1} parent=55 // pred_region
          %s429 = sand.u32 %s119, 1
          %s430 = scalar_lea.sflag [#allocation4], %s429
          %s431 = sand.u32 %s119, 1
          %s432 = smul.addr %s431, 16
          %s433 = scalar_lea.vmem [#allocation8], %s432
          %435 = dma.done %s430, 256
        $region60: #{tpu_custom_call.1} parent=55 // pred_fallthru
          _
        // Predicated region
        $region61: #{tpu_custom_call.1} parent=55 // pred_check
          %p436 = pneg %p162
        $region62: #{tpu_custom_call.1} parent=55 // pred_check_branch
          %438 = sbr.rel (%p436) target = $region64
        $region63: #{tpu_custom_call.1} parent=55 // pred_region
          %s439 = sand.u32 %s147, 1
          %s440 = scalar_lea.sflag [#allocation10], %s439
          %s441 = sand.u32 %s147, 1
          %s442 = smul.addr %s441, 16
          %s443 = scalar_lea.vmem [#allocation9], %s442
          %445 = dma.done %s440, 256
        $region64: #{tpu_custom_call.1} parent=55 // pred_fallthru
          _
      $region56: #{tpu_custom_call.1} parent=5 // pred_fallthru
        _
    $region6: #{tpu_custom_call.1} parent=1 // loop_footer
      %s25 = sadd.s32 1, %s21
    $region7: #{tpu_custom_call.1} parent=1 // loop_footer_branch
      %20 = sbr.rel target = $region3
    $region8: #{tpu_custom_call.1} parent=1 // loop_exit
      _
    %446 = vsyncpa [#allocation3], 1
    %s447 = scalar_lea.sflag [#allocation3], 1
    %448 = vsyncpa %s447, 1
    %449 = vsyncpa [#allocation6], 1
    %450 = vsyncpa [#allocation4], 1
    %s451 = scalar_lea.sflag [#allocation4], 1
    %452 = vsyncpa %s451, 1
    %453 = vsyncpa [#allocation10], 1
    %s454 = scalar_lea.sflag [#allocation10], 1
    %455 = vsyncpa %s454, 1

</llo_original>
